<compile_context>
chip_gen: v6e
topology: v6e:2x2x1
jax: 0.10.0
libtpu: 0.0.40
codegen_flags: <defaults>
</compile_context>

<pallas_src>
import functools

import jax
import jax.numpy as jnp
from jax.experimental import pallas as pl
from jax.experimental.pallas import tpu as pltpu


def _focal_loss_kernel(logits_ref, tgt_ref, out_ref, *, alpha, gamma,
                       hw, mask_pixels):
    logits = logits_ref[...].astype(jnp.float32)          # (nb, c, tp)
    tgt = tgt_ref[...].astype(jnp.int32)                   # (nb, 1, tp)
    nb, c, tp = logits.shape

    # Numerically stable log-sum-exp over the class (sublane) axis.  The
    # exp(shifted) slab is the only full (nb, c, tp) f32 temporary we need.
    m = jnp.max(logits, axis=1, keepdims=True)              # (nb, 1, tp)
    sumexp = jnp.sum(jnp.exp(logits - m), axis=1, keepdims=True)
    lse = jnp.log(sumexp)                                   # (nb, 1, tp)

    # Gather the target-class logit with a one-hot compare (classes on sublanes).
    cls_idx = jax.lax.broadcasted_iota(jnp.int32, logits.shape, 1)
    onehot = cls_idx == tgt                                  # (nb, c, tp) bool
    logit_t = jnp.sum(jnp.where(onehot, logits, 0.0), axis=1, keepdims=True)

    # alpha[target]: alpha entries are compile-time Python floats, so this is a
    # short unrolled chain of row-sized (nb, 1, tp) selects -- no VMEM stream.
    alpha_t = jnp.zeros_like(logit_t)
    for j, a in enumerate(alpha):
        alpha_t = alpha_t + float(a) * (tgt == j).astype(jnp.float32)

    # F.cross_entropy(..., weight=alpha, reduction='none'):
    #   ce = -alpha[t] * log_softmax[t] = alpha[t] * (m + lse - logit_t) >= 0
    ce = alpha_t * (m + lse - logit_t)                       # (nb, 1, tp)

    # Focal weight (1 - p) ** gamma with p = exp(-ce).
    # NOTE: -expm1(-ce) would avoid cancellation for ce -> 0, but expm1 has no
    # guaranteed Mosaic lowering; with focal ~ ce**(gamma+1) for small ce the
    # absolute error of 1 - exp(-ce) is negligible for the mean loss.
    one_minus_p = 1.0 - jnp.exp(-ce)
    if gamma == int(gamma) and 0 <= int(gamma) <= 4:
        w = jnp.ones_like(one_minus_p)
        for _ in range(int(gamma)):                          # VPU, no pow on EUP
            w = w * one_minus_p
    else:
        w = one_minus_p ** gamma
    focal = w * ce                                           # (nb, 1, tp)

    # Ragged pixel tail: those lanes hold uninitialized data (targets may alias
    # a valid class, logits may be NaN/Inf), so zero them explicitly.
    if mask_pixels:
        pix = (pl.program_id(0) * tp
               + jax.lax.broadcasted_iota(jnp.int32, focal.shape, 2))
        focal = jnp.where(pix < hw, focal, 0.0)

    # One scalar partial per grid step; final reduction happens outside.
    out_ref[0, 0] = jnp.sum(focal)


def focal_loss(output, target, alpha, gamma, *, max_tile_p=None):
    n, c, h, w = output.shape
    hw = h * w
    num_pixels = n * hw

    alpha = tuple(float(a) for a in alpha)
    assert len(alpha) == c, 'Length of weight tensor must match the number of classes'

    # Reshape only (free): keep NCHW contiguity, keep the caller's dtypes
    # (bf16 logits / narrow int targets are widened in-kernel, not in HBM).
    logits = output.reshape(n, c, hw)
    tgt = target.reshape(n, 1, hw)
    if not jnp.issubdtype(tgt.dtype, jnp.integer):
        tgt = tgt.astype(jnp.int32)

    logit_bytes = logits.dtype.itemsize
    tgt_bytes = tgt.dtype.itemsize

    # --- Tile sizing ---------------------------------------------------------
    # Conservative per-pixel VMEM estimate (bytes): double-buffered, sublane-
    # padded input blocks + ~2 live (c_pad, tile) f32 slabs + ~5 live f32 rows
    # (rows spill at 8-sublane granularity).  Budget 22 MiB of footprint under
    # an explicit 32 MiB vmem limit -> works on v5e/v6e/v7x.
    c_pad = ((c + 7) // 8) * 8
    per_pixel_vmem = (2 * (c_pad * logit_bytes + 8 * tgt_bytes)
                      + 2 * c_pad * 4
                      + 5 * 8 * 4)
    vmem_budget = 22 * 1024 * 1024
    budget_pixels = max(128, vmem_budget // per_pixel_vmem)
    if max_tile_p is not None:                    # test/tuning knob
        budget_pixels = min(budget_pixels, int(max_tile_p))

    if hw <= budget_pixels:
        # Whole image per step (block == full H*W dim, always layout-legal);
        # pack several images per step so small images still move real bytes.
        tile_p = hw
        num_pixel_tiles = 1
        mask_pixels = False
        nb_cap = int(min(n, max(1, budget_pixels // max(tile_p, 1))))
        nb = 1
        for d in range(nb_cap, 0, -1):            # largest divisor of n <= cap
            if n % d == 0:
                nb = d
                break
    else:
        tile_p = max(128, (budget_pixels // 128) * 128)
        num_pixel_tiles = int(pl.cdiv(hw, tile_p))
        mask_pixels = (hw % tile_p) != 0          # ragged tail masked in-kernel
        nb = 1
    num_batch_blocks = n // nb

    kernel = functools.partial(_focal_loss_kernel, alpha=alpha,
                               gamma=float(gamma), hw=hw,
                               mask_pixels=mask_pixels)

    partials = pl.pallas_call(
        kernel,
        out_shape=jax.ShapeDtypeStruct((num_pixel_tiles, num_batch_blocks),
                                       jnp.float32),
        grid=(num_pixel_tiles, num_batch_blocks),
        in_specs=[
            pl.BlockSpec((nb, c, tile_p), lambda t, b: (b, 0, t)),
            pl.BlockSpec((nb, 1, tile_p), lambda t, b: (b, 0, t)),
        ],
        out_specs=pl.BlockSpec((1, 1), lambda t, b: (t, b),
                               memory_space=pltpu.SMEM),
        compiler_params=pltpu.CompilerParams(
            dimension_semantics=("parallel", "parallel"),
            vmem_limit_bytes=32 * 1024 * 1024),
    )(logits, tgt)

    return jnp.sum(partials) / jnp.float32(num_pixels)


def _reference_focal_loss(output, target, alpha, gamma):
    # Pure-JAX reference mirroring the PyTorch module.
    logsm = jax.nn.log_softmax(output.astype(jnp.float32), axis=1)
    logp_t = jnp.take_along_axis(
        logsm, target[:, None, :, :].astype(jnp.int32), axis=1)[:, 0]
    alpha_t = jnp.asarray(alpha, jnp.float32)[target]
    ce = -alpha_t * logp_t
    p = jnp.exp(-ce)
    return jnp.mean((1.0 - p) ** gamma * ce)


if __name__ == "__main__":
    key = jax.random.PRNGKey(0)
    k1, k2, k3, k4 = jax.random.split(key, 4)

    alpha = [0.1, 0.2, 0.3, 0.4]
    gamma = 2.0

    # Case 1: whole image per tile, both images packed into one grid step.
    N, C, H, W = 2, 4, 16, 16
    out1 = jax.random.normal(k1, (N, C, H, W), dtype=jnp.float32)
    tgt1 = jax.random.randint(k2, (N, H, W), 0, C, dtype=jnp.int32)
    loss1 = jax.block_until_ready(focal_loss(out1, tgt1, alpha, gamma))
    ref1 = _reference_focal_loss(out1, tgt1, alpha, gamma)
    assert jnp.allclose(loss1, ref1, rtol=1e-5, atol=1e-6), (loss1, ref1)

    # Case 2: force small pixel tiles -> multiple tiles + ragged-tail masking.
    N, C, H, W = 2, 4, 20, 20
    out2 = jax.random.normal(k3, (N, C, H, W), dtype=jnp.float32)
    tgt2 = jax.random.randint(k4, (N, H, W), 0, C, dtype=jnp.int32)
    loss2 = jax.block_until_ready(
        focal_loss(out2, tgt2, alpha, gamma, max_tile_p=128))
    ref2 = _reference_focal_loss(out2, tgt2, alpha, gamma)
    assert jnp.allclose(loss2, ref2, rtol=1e-5, atol=1e-6), (loss2, ref2)

    print("KERNEL_OK")
</pallas_src>

<mosaic_0001>
module attributes {stable_mosaic.version = 11 : i64} {
  func.func @_focal_loss_kernel(%arg0: i32, %arg1: i32, %arg2: memref<2x4x256xf32, #tpu.memory_space<vmem>>, %arg3: memref<2x1x256xi32, #tpu.memory_space<vmem>>, %arg4: memref<1x1xf32, #tpu.memory_space<smem>>) attributes {dimension_semantics = [#tpu.dimension_semantics<parallel>, #tpu.dimension_semantics<parallel>], iteration_bounds = array<i64: 1, 1>, scalar_prefetch = 0 : i64, scratch_operands = 0 : i64, tpu.core_type = #tpu.core_type<tc>, window_params = [{transform_indices = @transform_0, window_bounds = array<i64: 2, 4, 256>}, {transform_indices = @transform_1, window_bounds = array<i64: 2, 1, 256>}, {transform_indices = @transform_2, window_bounds = array<i64: 1, 1>}]} {
    %c0 = arith.constant 0 : index
    %c0_0 = arith.constant 0 : index
    %c0_1 = arith.constant 0 : index
    %0 = vector.load %arg2[%c0, %c0_0, %c0_1] : memref<2x4x256xf32, #tpu.memory_space<vmem>>, vector<2x4x256xf32>
    %c0_2 = arith.constant 0 : index
    %c0_3 = arith.constant 0 : index
    %c0_4 = arith.constant 0 : index
    %1 = vector.load %arg3[%c0_2, %c0_3, %c0_4] : memref<2x1x256xi32, #tpu.memory_space<vmem>>, vector<2x1x256xi32>
    %cst = arith.constant dense<0xFF800000> : vector<2x256xf32>
    %2 = vector.multi_reduction <maximumf>, %0, %cst [1] : vector<2x4x256xf32> to vector<2x256xf32>
    %3 = vector.shape_cast %2 : vector<2x256xf32> to vector<2x1x256xf32>
    %4 = vector.broadcast %3 : vector<2x1x256xf32> to vector<2x4x256xf32>
    %5 = arith.subf %0, %4 : vector<2x4x256xf32>
    %6 = math.exp %5 : vector<2x4x256xf32>
    %cst_5 = arith.constant dense<0.000000e+00> : vector<2x256xf32>
    %7 = vector.multi_reduction <add>, %6, %cst_5 [1] : vector<2x4x256xf32> to vector<2x256xf32>
    %8 = vector.shape_cast %7 : vector<2x256xf32> to vector<2x1x256xf32>
    %9 = math.log %8 : vector<2x1x256xf32>
    %10 = tpu.iota {dimensions = array<i32: 1>} : vector<2x4x256xi32>
    %11 = vector.broadcast %1 : vector<2x1x256xi32> to vector<2x4x256xi32>
    %12 = arith.cmpi eq, %10, %11 : vector<2x4x256xi32>
    %cst_6 = arith.constant 0.000000e+00 : f32
    %13 = vector.broadcast %cst_6 : f32 to vector<2x4x256xf32>
    %14 = arith.select %12, %0, %13 : vector<2x4x256xi1>, vector<2x4x256xf32>
    %cst_7 = arith.constant dense<0.000000e+00> : vector<2x256xf32>
    %15 = vector.multi_reduction <add>, %14, %cst_7 [1] : vector<2x4x256xf32> to vector<2x256xf32>
    %16 = vector.shape_cast %15 : vector<2x256xf32> to vector<2x1x256xf32>
    %cst_8 = arith.constant 0.000000e+00 : f32
    %17 = vector.broadcast %cst_8 : f32 to vector<2x1x256xf32>
    %c0_i32 = arith.constant 0 : i32
    %18 = vector.broadcast %c0_i32 : i32 to vector<2x1x256xi32>
    %19 = arith.cmpi eq, %1, %18 : vector<2x1x256xi32>
    %20 = arith.extui %19 : vector<2x1x256xi1> to vector<2x1x256xi32>
    %21 = arith.sitofp %20 : vector<2x1x256xi32> to vector<2x1x256xf32>
    %cst_9 = arith.constant 1.000000e-01 : f32
    %22 = vector.broadcast %cst_9 : f32 to vector<2x1x256xf32>
    %23 = arith.mulf %22, %21 : vector<2x1x256xf32>
    %24 = arith.addf %17, %23 : vector<2x1x256xf32>
    %c1_i32 = arith.constant 1 : i32
    %25 = vector.broadcast %c1_i32 : i32 to vector<2x1x256xi32>
    %26 = arith.cmpi eq, %1, %25 : vector<2x1x256xi32>
    %27 = arith.extui %26 : vector<2x1x256xi1> to vector<2x1x256xi32>
    %28 = arith.sitofp %27 : vector<2x1x256xi32> to vector<2x1x256xf32>
    %cst_10 = arith.constant 2.000000e-01 : f32
    %29 = vector.broadcast %cst_10 : f32 to vector<2x1x256xf32>
    %30 = arith.mulf %29, %28 : vector<2x1x256xf32>
    %31 = arith.addf %24, %30 : vector<2x1x256xf32>
    %c2_i32 = arith.constant 2 : i32
    %32 = vector.broadcast %c2_i32 : i32 to vector<2x1x256xi32>
    %33 = arith.cmpi eq, %1, %32 : vector<2x1x256xi32>
    %34 = arith.extui %33 : vector<2x1x256xi1> to vector<2x1x256xi32>
    %35 = arith.sitofp %34 : vector<2x1x256xi32> to vector<2x1x256xf32>
    %cst_11 = arith.constant 3.000000e-01 : f32
    %36 = vector.broadcast %cst_11 : f32 to vector<2x1x256xf32>
    %37 = arith.mulf %36, %35 : vector<2x1x256xf32>
    %38 = arith.addf %31, %37 : vector<2x1x256xf32>
    %c3_i32 = arith.constant 3 : i32
    %39 = vector.broadcast %c3_i32 : i32 to vector<2x1x256xi32>
    %40 = arith.cmpi eq, %1, %39 : vector<2x1x256xi32>
    %41 = arith.extui %40 : vector<2x1x256xi1> to vector<2x1x256xi32>
    %42 = arith.sitofp %41 : vector<2x1x256xi32> to vector<2x1x256xf32>
    %cst_12 = arith.constant 4.000000e-01 : f32
    %43 = vector.broadcast %cst_12 : f32 to vector<2x1x256xf32>
    %44 = arith.mulf %43, %42 : vector<2x1x256xf32>
    %45 = arith.addf %38, %44 : vector<2x1x256xf32>
    %46 = arith.addf %3, %9 : vector<2x1x256xf32>
    %47 = arith.subf %46, %16 : vector<2x1x256xf32>
    %48 = arith.mulf %45, %47 : vector<2x1x256xf32>
    %cst_13 = arith.constant 0.000000e+00 : f32
    %49 = vector.broadcast %cst_13 : f32 to vector<2x1x256xf32>
    %50 = arith.subf %49, %48 : vector<2x1x256xf32>
    %51 = math.exp %50 : vector<2x1x256xf32>
    %cst_14 = arith.constant 1.000000e+00 : f32
    %52 = vector.broadcast %cst_14 : f32 to vector<2x1x256xf32>
    %53 = arith.subf %52, %51 : vector<2x1x256xf32>
    %cst_15 = arith.constant 1.000000e+00 : f32
    %54 = vector.broadcast %cst_15 : f32 to vector<2x1x256xf32>
    %55 = arith.mulf %54, %53 : vector<2x1x256xf32>
    %56 = arith.mulf %55, %53 : vector<2x1x256xf32>
    %57 = arith.mulf %56, %48 : vector<2x1x256xf32>
    %58 = vector.shape_cast %57 : vector<2x1x256xf32> to vector<1x2x1x256xf32>
    %cst_16 = arith.constant dense<0.000000e+00> : vector<1xf32>
    %59 = vector.multi_reduction <add>, %58, %cst_16 [1, 2, 3] : vector<1x2x1x256xf32> to vector<1xf32>
    %60 = vector.shape_cast %59 : vector<1xf32> to vector<1x1x1x1xf32>
    %61 = vector.extract %60[0, 0, 0, 0] : f32 from vector<1x1x1x1xf32>
    %c0_17 = arith.constant 0 : index
    %c0_18 = arith.constant 0 : index
    %62 = memref.load %arg4[%c0_17, %c0_18] : memref<1x1xf32, #tpu.memory_space<smem>>
    memref.store %61, %arg4[%c0_17, %c0_18] : memref<1x1xf32, #tpu.memory_space<smem>>
    return
  }
  func.func @transform_0(%arg0: i32, %arg1: i32) -> (i32, i32, i32) {
    %c0_i32 = arith.constant 0 : i32
    %c0_i32_0 = arith.constant 0 : i32
    return %arg1, %c0_i32, %arg0 : i32, i32, i32
  }
  func.func @transform_1(%arg0: i32, %arg1: i32) -> (i32, i32, i32) {
    %c0_i32 = arith.constant 0 : i32
    %c0_i32_0 = arith.constant 0 : i32
    return %arg1, %c0_i32, %arg0 : i32, i32, i32
  }
  func.func @transform_2(%arg0: i32, %arg1: i32) -> (i32, i32) {
    %c0_i32 = arith.constant 0 : i32
    return %arg0, %arg1 : i32, i32
  }
}

</mosaic_0001>

<llo_original>
// kernel: tpu_custom_call.1
$region0: #{tpu_custom_call.1}
  #allocation0 [shape = 'u32[]', space=smem, size = 0x4, offset = 0x4, fixed_abs, tag = 'smem constant byte address 0x4 - core index']
  #allocation1 [shape = 'u32[144,128]{1,0:T(1,128)}', space=vmem, size = 0x12000, scoped, tag = 'internal scratch']
  %s0 = inlined_call_operand.hbm [shape: f32[2,4,256], index: 0, kind: input, shape index: {}]
  %s1 = inlined_call_operand.hbm [shape: s32[2,1,256], index: 1, kind: input, shape index: {}]
  %s2 = inlined_call_operand.hbm [shape: f32[1,1], index: 2, kind: output, shape index: {}]
  %s3 = sld [smem:[#allocation0]]
  $region26: #{tpu_custom_call.1} parent=0
    _
  %s5 = ssub.s32 1, %s3
  %s6 = scalar_select 0, %s5, %s3
  $region1: #{tpu_custom_call.1} parent=0
    #allocation2 [shape = 'u8[8192]{0}', space=vmem, size = 0x2000, scoped, tag = 'input window, operand 0, single buffered']
    #allocation3 [shape = 's32[1]{0}', space=sflag, size = 0x4, scoped, tag = 'scoped memory for tpu_custom_call.1']
    #allocation4 [shape = 's32[1]{0}', space=sflag, size = 0x4, scoped, tag = 'scoped memory for tpu_custom_call.1']
    #allocation5 [shape = 'u8[2048]{0}', space=vmem, size = 0x800, scoped, tag = 'input window, operand 1, single buffered']
    #allocation6 [shape = 's32[1]{0}', space=sflag, size = 0x4, scoped, tag = 'scoped memory for tpu_custom_call.1']
    #allocation7 [shape = 'u8[512]{0}', space=smem, size = 0x200, scoped, tag = 'output window, operand 0, single buffered']
    %7 = vsyncpa [#allocation3], 0
    %8 = vsyncpa [#allocation6], 0
    %9 = vsyncpa [#allocation4], 0
    // Predicated region
    $region2: #{tpu_custom_call.1} parent=1 // pred_check
      _
    $region3: #{tpu_custom_call.1} parent=1 // pred_check_branch
      %11 = sbr.rel (0) target = $region5
    $region4: #{tpu_custom_call.1} parent=1 // pred_region
      %s13 = ssub.s32 256, 256
      %14 = vsyncadd [#allocation3], %s13
      %s15 = sshll.u32 [#allocation2], 4
      %s16 = int_to_ptr.vmem [resolvable:$true] %s15
      %21 = dma.hbm_to_vmem [thread:$0]  %s0, 256, %s16, [#allocation3], 128, 128, 8
    $region5: #{tpu_custom_call.1} parent=1 // pred_fallthru
      _
    // Predicated region
    $region6: #{tpu_custom_call.1} parent=1 // pred_check
      _
    $region7: #{tpu_custom_call.1} parent=1 // pred_check_branch
      %23 = sbr.rel (0) target = $region9
    $region8: #{tpu_custom_call.1} parent=1 // pred_region
      %s25 = ssub.s32 64, 64
      %26 = vsyncadd [#allocation6], %s25
      %s27 = sshll.u32 [#allocation5], 4
      %s28 = int_to_ptr.vmem [resolvable:$true] %s27
      %33 = dma.hbm_to_vmem [thread:$0]  %s1, 64, %s28, [#allocation6], 32, 32, 2
    $region9: #{tpu_custom_call.1} parent=1 // pred_fallthru
      _
    // Predicated region
    $region10: #{tpu_custom_call.1} parent=1 // pred_check
      _
    $region11: #{tpu_custom_call.1} parent=1 // pred_check_branch
      %35 = sbr.rel (0) target = $region13
    $region12: #{tpu_custom_call.1} parent=1 // pred_region
      %36 = dma.done [#allocation3], 256
    $region13: #{tpu_custom_call.1} parent=1 // pred_fallthru
      _
    // Predicated region
    $region14: #{tpu_custom_call.1} parent=1 // pred_check
      _
    $region15: #{tpu_custom_call.1} parent=1 // pred_check_branch
      %38 = sbr.rel (0) target = $region17
    $region16: #{tpu_custom_call.1} parent=1 // pred_region
      %39 = dma.done [#allocation6], 64
    $region17: #{tpu_custom_call.1} parent=1 // pred_fallthru
      _
    %v40 = vld [vmem:[#allocation2] sm:$0xff]
    %v41 = vld [vmem:[#allocation2 + $0x8] sm:$0xff]
    %v42 = vld [vmem:[#allocation5] sm:$0x3]
    %v43 = vld [vmem:[#allocation5 + $0x2] sm:$0x3]
    %v46 = vcombine.high %v40, %v40
    %v47 = vcombine.high %v41, %v41
    %vm50 = vcmask 1043456
    %v51 = vsel %vm50, %v40, -inf
    %v52 = vrot.slane %v51, 4
    %v53 = vmax.f32 %v51, %v52
    %v54 = vrot.slane %v53, 2
    %v55 = vmax.f32 %v53, %v54
    %v56 = vrot.slane %v55, 1
    %v57 = vmax.f32 %v55, %v56
    %v58 = vsel %vm50, %v46, -inf
    %v59 = vrot.slane %v58, 4
    %v60 = vmax.f32 %v58, %v59
    %v61 = vrot.slane %v60, 2
    %v62 = vmax.f32 %v60, %v61
    %v63 = vrot.slane %v62, 1
    %v64 = vmax.f32 %v62, %v63
    %v65 = vsel %vm50, %v41, -inf
    %v66 = vrot.slane %v65, 4
    %v67 = vmax.f32 %v65, %v66
    %v68 = vrot.slane %v67, 2
    %v69 = vmax.f32 %v67, %v68
    %v70 = vrot.slane %v69, 1
    %v71 = vmax.f32 %v69, %v70
    %v72 = vsel %vm50, %v47, -inf
    %v73 = vrot.slane %v72, 4
    %v74 = vmax.f32 %v72, %v73
    %v75 = vrot.slane %v74, 2
    %v76 = vmax.f32 %v74, %v75
    %v77 = vrot.slane %v76, 1
    %v78 = vmax.f32 %v76, %v77
    %v83 = vcombine.low %v57, %v64
    %v84 = vcombine.low %v71, %v78
    %v87 = vsub.f32 %v40, %v83
    %v88 = vsub.f32 %v41, %v84
    %v89 = vmul.f32 %v87, 1.442695
    %v90 = vpow.pop %v89
    %v91 = vmul.f32 %v88, 1.442695
    %v92 = vpow.pop %v91
    %v95 = vcombine.high %v90, %v90
    %v96 = vcombine.high %v92, %v92
    %v99 = vsel %vm50, %v90, 0.0
    %v100 = vrot.slane %v99, 4
    %v101 = vadd.f32 %v99, %v100
    %v102 = vrot.slane %v101, 2
    %v103 = vadd.f32 %v101, %v102
    %v104 = vrot.slane %v103, 1
    %v105 = vadd.f32 %v103, %v104
    %v106 = vsel %vm50, %v95, 0.0
    %v107 = vrot.slane %v106, 4
    %v108 = vadd.f32 %v106, %v107
    %v109 = vrot.slane %v108, 2
    %v110 = vadd.f32 %v108, %v109
    %v111 = vrot.slane %v110, 1
    %v112 = vadd.f32 %v110, %v111
    %v113 = vsel %vm50, %v92, 0.0
    %v114 = vrot.slane %v113, 4
    %v115 = vadd.f32 %v113, %v114
    %v116 = vrot.slane %v115, 2
    %v117 = vadd.f32 %v115, %v116
    %v118 = vrot.slane %v117, 1
    %v119 = vadd.f32 %v117, %v118
    %v120 = vsel %vm50, %v96, 0.0
    %v121 = vrot.slane %v120, 4
    %v122 = vadd.f32 %v120, %v121
    %v123 = vrot.slane %v122, 2
    %v124 = vadd.f32 %v122, %v123
    %v125 = vrot.slane %v124, 1
    %v126 = vadd.f32 %v124, %v125
    %v127 = vlog2.pop %v105
    %v128 = vmul.f32 %v127, 0.6931472
    %v129 = vlog2.pop %v112
    %v130 = vmul.f32 %v129, 0.6931472
    %v131 = vlog2.pop %v119
    %v132 = vmul.f32 %v131, 0.6931472
    %v133 = vlog2.pop %v126
    %v134 = vmul.f32 %v133, 0.6931472
    %v135 = vlaneseq
    %v136 = vshrl.u32 %v135, 7
    %v137 = vlaneseq
    %v138 = vshrl.u32 %v137, 7
    %v139 = vsub.s32 0, %v138
    %v140 = vrot.slane %v42, %v139
    %v141 = vlaneseq
    %v142 = vshrl.u32 %v141, 7
    %v143 = vsub.s32 1, %v142
    %v144 = vrot.slane %v42, %v143
    %v145 = vlaneseq
    %v146 = vshrl.u32 %v145, 7
    %v147 = vsub.s32 0, %v146
    %v148 = vrot.slane %v43, %v147
    %v149 = vlaneseq
    %v150 = vshrl.u32 %v149, 7
    %v151 = vsub.s32 1, %v150
    %v152 = vrot.slane %v43, %v151
    %vm153 = vcmp.eq.s32.totalorder %v136, %v140
    %vm154 = vcmp.eq.s32.totalorder %v136, %v144
    %vm155 = vcmp.eq.s32.totalorder %v136, %v148
    %vm156 = vcmp.eq.s32.totalorder %v136, %v152
    %v157 = vsel %vm153, %v40, 0.0
    %v158 = vsel %vm154, %v46, 0.0
    %v159 = vsel %vm155, %v41, 0.0
    %v160 = vsel %vm156, %v47, 0.0
    %v161 = vsel %vm50, %v157, 0.0
    %v162 = vrot.slane %v161, 4
    %v163 = vadd.f32 %v161, %v162
    %v164 = vrot.slane %v163, 2
    %v165 = vadd.f32 %v163, %v164
    %v166 = vrot.slane %v165, 1
    %v167 = vadd.f32 %v165, %v166
    %v168 = vsel %vm50, %v158, 0.0
    %v169 = vrot.slane %v168, 4
    %v170 = vadd.f32 %v168, %v169
    %v171 = vrot.slane %v170, 2
    %v172 = vadd.f32 %v170, %v171
    %v173 = vrot.slane %v172, 1
    %v174 = vadd.f32 %v172, %v173
    %v175 = vsel %vm50, %v159, 0.0
    %v176 = vrot.slane %v175, 4
    %v177 = vadd.f32 %v175, %v176
    %v178 = vrot.slane %v177, 2
    %v179 = vadd.f32 %v177, %v178
    %v180 = vrot.slane %v179, 1
    %v181 = vadd.f32 %v179, %v180
    %v182 = vsel %vm50, %v160, 0.0
    %v183 = vrot.slane %v182, 4
    %v184 = vadd.f32 %v182, %v183
    %v185 = vrot.slane %v184, 2
    %v186 = vadd.f32 %v184, %v185
    %v187 = vrot.slane %v186, 1
    %v188 = vadd.f32 %v186, %v187
    %vm189 = vcmp.eq.s32.totalorder %v42, 0
    %vm190 = vcmp.eq.s32.totalorder %v43, 0
    %v191 = vsel %vm189, 1, 0
    %v192 = vsel %vm190, 1, 0
    %v193 = vcvt.s32.f32 %v191
    %v194 = vcvt.s32.f32 %v192
    %v195 = vmul.f32 %v193, 0.1
    %v196 = vmul.f32 %v194, 0.1
    %v197 = vadd.f32 %v195, 0.0
    %v198 = vadd.f32 %v196, 0.0
    %vm199 = vcmp.eq.s32.totalorder %v42, 1
    %vm200 = vcmp.eq.s32.totalorder %v43, 1
    %v201 = vsel %vm199, 1, 0
    %v202 = vsel %vm200, 1, 0
    %v203 = vcvt.s32.f32 %v201
    %v204 = vcvt.s32.f32 %v202
    %v205 = vmul.f32 %v203, 0.2
    %v206 = vmul.f32 %v204, 0.2
    %v207 = vadd.f32 %v197, %v205
    %v208 = vadd.f32 %v198, %v206
    %vm209 = vcmp.eq.s32.totalorder %v42, 2
    %vm210 = vcmp.eq.s32.totalorder %v43, 2
    %v211 = vsel %vm209, 1, 0
    %v212 = vsel %vm210, 1, 0
    %v213 = vcvt.s32.f32 %v211
    %v214 = vcvt.s32.f32 %v212
    %v215 = vmul.f32 %v213, 0.3
    %v216 = vmul.f32 %v214, 0.3
    %v217 = vadd.f32 %v207, %v215
    %v218 = vadd.f32 %v208, %v216
    %vm219 = vcmp.eq.s32.totalorder %v42, 3
    %vm220 = vcmp.eq.s32.totalorder %v43, 3
    %v221 = vsel %vm219, 1, 0
    %v222 = vsel %vm220, 1, 0
    %v223 = vcvt.s32.f32 %v221
    %v224 = vcvt.s32.f32 %v222
    %v225 = vmul.f32 %v223, 0.4
    %v226 = vmul.f32 %v224, 0.4
    %v227 = vadd.f32 %v217, %v225
    %v228 = vadd.f32 %v218, %v226
    %v229 = vadd.f32 %v57, %v128
    %v230 = vadd.f32 %v64, %v130
    %v231 = vadd.f32 %v71, %v132
    %v232 = vadd.f32 %v78, %v134
    %v233 = vsub.f32 %v229, %v167
    %v234 = vsub.f32 %v230, %v174
    %v235 = vsub.f32 %v231, %v181
    %v236 = vsub.f32 %v232, %v188
    %v241 = vcombine.low %v233, %v234
    %v243 = vunpack.c.l.s4 1966171168
    %v244 = vunpack.c.0.s8 %v243
    %v245 = vlaneseq
    %v246 = vshrl.u32 %v245, 7
    %v247 = vsub.s32 %v244, %v246
    %v248 = vrot.slane %v241, %v247
    %v250 = vunpack.c.l.s4 1966171168
    %v251 = vunpack.c.0.s8 %v250
    %v252 = vlaneseq
    %v253 = vshrl.u32 %v252, 7
    %v254 = vsub.s32 %v251, %v253
    %v255 = vrot.slane %v248, %v254
    %v256 = vcombine.low %v235, %v236
    %v258 = vunpack.c.l.s4 1966171168
    %v259 = vunpack.c.0.s8 %v258
    %v260 = vlaneseq
    %v261 = vshrl.u32 %v260, 7
    %v262 = vsub.s32 %v259, %v261
    %v263 = vrot.slane %v256, %v262
    %v265 = vunpack.c.l.s4 1966171168
    %v266 = vunpack.c.0.s8 %v265
    %v267 = vlaneseq
    %v268 = vshrl.u32 %v267, 7
    %v269 = vsub.s32 %v266, %v268
    %v270 = vrot.slane %v263, %v269
    %v273 = vmul.f32 %v227, %v255
    %v274 = vmul.f32 %v228, %v270
    %v275 = vsub.f32 0.0, %v273
    %v276 = vsub.f32 0.0, %v274
    %v277 = vmul.f32 %v275, 1.442695
    %v278 = vpow.pop %v277
    %v279 = vmul.f32 %v276, 1.442695
    %v280 = vpow.pop %v279
    %v281 = vsub.f32 1.0, %v278
    %v282 = vsub.f32 1.0, %v280
    %v283 = vmul.f32 %v281, %v281
    %v284 = vmul.f32 %v282, %v282
    %v285 = vmul.f32 %v283, %v273
    %v286 = vmul.f32 %v284, %v274
    %v289 = vlaneseq
    %v290 = vshrl.u32 %v289, 7
    %v291 = vsub.s32 0, %v290
    %v292 = vrot.slane %v285, %v291
    %v293 = vlaneseq
    %v294 = vshrl.u32 %v293, 7
    %v295 = vsub.s32 1, %v294
    %v296 = vrot.slane %v285, %v295
    %v297 = vlaneseq
    %v298 = vshrl.u32 %v297, 7
    %v299 = vsub.s32 0, %v298
    %v300 = vrot.slane %v286, %v299
    %v301 = vlaneseq
    %v302 = vshrl.u32 %v301, 7
    %v303 = vsub.s32 1, %v302
    %v304 = vrot.slane %v286, %v303
    %vm309 = vcmask 1040384
    %v310 = vsel %vm309, %v292, 0.0
    %v311 = vsel %vm309, %v296, 0.0
    %v312 = vadd.f32 %v310, %v311
    %v313 = vsel %vm309, %v300, 0.0
    %v314 = vadd.f32 %v312, %v313
    %v315 = vsel %vm309, %v304, 0.0
    %v316 = vadd.f32 %v314, %v315
    %317 = vadd.xlane.f32.xlu0 %v316
    %v318 = vpop.xlane.xlu0 %317
    %v319 = vrot.slane %v318, 4
    %v320 = vadd.f32 %v318, %v319
    %v321 = vrot.slane %v320, 2
    %v322 = vadd.f32 %v320, %v321
    %v323 = vrot.slane %v322, 1
    %v324 = vadd.f32 %v322, %v323
    %s325 = vtos %v324
    %s326 = scalar_lea.smem [#allocation7], 0
    %327 = sst [smem:[%s326]] %s325
    // Predicated region
    $region18: #{tpu_custom_call.1} parent=1 // pred_check
      _
    $region19: #{tpu_custom_call.1} parent=1 // pred_check_branch
      %329 = sbr.rel (0) target = $region21
    $region20: #{tpu_custom_call.1} parent=1 // pred_region
      %s331 = ssub.s32 16, 16
      %332 = vsyncadd [#allocation4], %s331
      %335 = dma.smem_to_hbm [#allocation7], 16, %s2, [#allocation4]
    $region21: #{tpu_custom_call.1} parent=1 // pred_fallthru
      _
    // Predicated region
    $region22: #{tpu_custom_call.1} parent=1 // pred_check
      _
    $region23: #{tpu_custom_call.1} parent=1 // pred_check_branch
      %337 = sbr.rel (0) target = $region25
    $region24: #{tpu_custom_call.1} parent=1 // pred_region
      %338 = dma.done [#allocation4], 16
    $region25: #{tpu_custom_call.1} parent=1 // pred_fallthru
      _
    %339 = sfence
    %340 = vsyncpa [#allocation3], 1
    %341 = vsyncpa [#allocation6], 1
    %342 = vsyncpa [#allocation4], 1

</llo_original>
